<compile_context>
chip_gen: v6e
topology: v6e:2x2x1
jax: 0.10.0
libtpu: 0.0.40
codegen_flags: <defaults>
</compile_context>

<pallas_src>
import functools

import jax
import jax.numpy as jnp
from jax.experimental import pallas as pl
from jax.experimental.pallas import tpu as pltpu


def _hw_config():
    """Per-generation tuning.

    v7x: 64 MiB VMEM per TensorCore, 2 TCs per chip -> smaller blocks
    (steady-state live VMEM ~= 2x in + 2x out double-buffers + ~5 block-sized
    temporaries ~= 9-11x block) and >=8 grid steps so both TCs stay busy.
    v5e/v6e: 128 MiB VMEM, single TC -> bigger blocks, no shrink-for-cores.
    """
    try:
        kind = jax.devices()[0].device_kind.lower()
    except Exception:
        kind = ""
    if "v7" in kind:
        return {"block_bytes": 2 * 1024 * 1024,
                "vmem_limit": 48 * 1024 * 1024,
                "min_steps": 8}          # >= 4 grid steps per TensorCore
    return {"block_bytes": 4 * 1024 * 1024,
            "vmem_limit": 64 * 1024 * 1024,
            "min_steps": 1}              # single TC: never shrink for cores


def _pick_tile(total, align, target_elems, min_steps):
    """Row-tile length: multiple of `align` (or the full extent), ~target
    elements, optionally shrunk so the grid keeps >= min_steps steps."""
    if total <= align:
        return total
    if target_elems >= total:
        tile = total
    else:
        tile = max(align, (target_elems // align) * align)
    while pl.cdiv(total, tile) < min_steps:
        new_tile = max(align, ((tile // 2) // align) * align)
        if new_tile == tile:
            break
        tile = new_tile
    return tile


def _topk_keep_kernel(x_ref, o_ref, *, k):
    """Keep the k largest entries along the last axis of the block, zero rest.

    Iterative selection (k is a tiny static constant, loop unrolled): each step
    finds the row max (XLU reduce #1), then the first index holding it
    (reduce #2), and overwrites that position with the sentinel in the working
    copy.  The final store keeps x wherever work hit the sentinel.  Ties
    resolve to the smallest index, matching "pick exactly k elements".
    The reduce axis always spans the full logical top-k extent (never tiled).
    """
    x = x_ref[...]
    n = x.shape[-1]
    col = jax.lax.broadcasted_iota(jnp.int32, x.shape, dimension=x.ndim - 1)

    if jnp.issubdtype(x.dtype, jnp.floating):
        sentinel = jnp.array(-jnp.inf, dtype=x.dtype)
        # torch.topk ranks NaN as largest; remap NaN -> +inf for selection only
        # (the original NaN value is what gets written out).
        work = jnp.where(jnp.isnan(x), jnp.array(jnp.inf, dtype=x.dtype), x)
    else:
        sentinel = jnp.array(jnp.iinfo(x.dtype).min, dtype=x.dtype)
        work = x

    for _ in range(k):                                           # static unroll
        m = jnp.max(work, axis=-1, keepdims=True)                      # reduce 1
        first = jnp.min(jnp.where(work == m, col, n),
                        axis=-1, keepdims=True)                        # reduce 2
        work = jnp.where(col == first, sentinel, work)

    # Reuse the block already loaded into vregs; zero everything not selected.
    o_ref[...] = jnp.where(work == sentinel, x, 0).astype(o_ref.dtype)


def get_top_k(x, k):
    """Pallas equivalent of GetTopK(k).forward(x): top-k along dim=-1, rest zeroed."""
    orig_shape = x.shape
    w = orig_shape[-1]
    r = 1
    for d in orig_shape[:-1]:
        r *= d
    k = min(int(k), w)
    if k <= 0:
        return jnp.zeros_like(x)

    cfg = _hw_config()
    itemsize = jnp.dtype(x.dtype).itemsize
    x2 = x.reshape(r, w)

    # Sublane alignment follows the packed native tile (8 f32 / 16 bf16 / 32 i8).
    align = 8 * max(1, 4 // itemsize)
    # VMEM budgeting: a (tr, w) tile occupies max(w, 128) lanes in VMEM even
    # though the HBM DMA only moves w elements per row.
    vmem_row_bytes = max(w, 128) * itemsize
    tr = _pick_tile(r, align, max(align, cfg["block_bytes"] // vmem_row_bytes),
                    cfg["min_steps"])
    grid = (pl.cdiv(r, tr),)   # ragged last block handled by Pallas, no pad/slice

    n_elem = r * w
    cost = pl.CostEstimate(
        flops=int(7 * k * n_elem),           # ~5-7 VALU ops / elem / k-step
        transcendentals=0,
        bytes_accessed=int(2 * n_elem * itemsize),   # 1R + 1W
    )

    out = pl.pallas_call(
        functools.partial(_topk_keep_kernel, k=k),
        out_shape=jax.ShapeDtypeStruct((r, w), x.dtype),
        grid_spec=pltpu.PrefetchScalarGridSpec(
            num_scalar_prefetch=0,
            grid=grid,
            in_specs=[pl.BlockSpec((tr, w), lambda i: (i, 0))],
            out_specs=pl.BlockSpec((tr, w), lambda i: (i, 0)),
        ),
        compiler_params=pltpu.CompilerParams(
            dimension_semantics=("parallel",),
            vmem_limit_bytes=cfg["vmem_limit"],
        ),
        cost_estimate=cost,
    )(x2)
    return out.reshape(orig_shape)


def _reference(x, k):
    """Pure-JAX reference: topk + scatter-back via one-hot (same as the torch module)."""
    vals, idx = jax.lax.top_k(x, k)
    onehot = jax.nn.one_hot(idx, x.shape[-1], dtype=x.dtype)     # (..., k, W)
    return jnp.einsum('...kn,...k->...n', onehot, vals)


if __name__ == "__main__":
    key0, key1, key2 = jax.random.split(jax.random.PRNGKey(0), 3)

    # NCHW-like input, top-k over W (last dim) -- small-W path (w < 128),
    # natural layout, no wrapper transposes.
    B, C, H, W = 2, 4, 16, 16
    k = 3
    x = jax.random.normal(key0, (B, C, H, W), dtype=jnp.float32)
    out = jax.block_until_ready(get_top_k(x, k))
    ref = _reference(x, k)
    assert out.shape == x.shape and out.dtype == x.dtype
    assert jnp.allclose(out, ref, atol=1e-6), "mismatch vs reference (small-W path)"

    # Wide last dim (W >= 128) with a non-multiple-of-8 row count -- exercises
    # the ragged last block (pl.cdiv grid, no pad/slice).
    x2 = jax.random.normal(key1, (2, 3, 5, 256), dtype=jnp.float32)
    out2 = jax.block_until_ready(get_top_k(x2, 4))
    ref2 = _reference(x2, 4)
    assert out2.shape == x2.shape and out2.dtype == x2.dtype
    assert jnp.allclose(out2, ref2, atol=1e-6), "mismatch vs reference (wide-W path)"

    # bf16 exercises the dtype-aware sublane alignment (16-row packed tiles).
    x3 = jax.random.normal(key2, (4, 8, 128), dtype=jnp.bfloat16)
    out3 = jax.block_until_ready(get_top_k(x3, 5))
    ref3 = _reference(x3, 5)
    assert out3.shape == x3.shape and out3.dtype == x3.dtype
    assert jnp.allclose(out3.astype(jnp.float32), ref3.astype(jnp.float32)), \
        "mismatch vs reference (bf16 path)"

    print("KERNEL_OK")
</pallas_src>

<mosaic_0001>
module attributes {stable_mosaic.version = 11 : i64} {
  func.func @_topk_keep_kernel(%arg0: i32, %arg1: memref<128x16xf32, #tpu.memory_space<vmem>>, %arg2: memref<128x16xf32, #tpu.memory_space<vmem>>) attributes {dimension_semantics = [#tpu.dimension_semantics<parallel>], iteration_bounds = array<i64: 1>, scalar_prefetch = 0 : i64, scratch_operands = 0 : i64, tpu.core_type = #tpu.core_type<tc>, window_params = [{transform_indices = @transform_0, window_bounds = array<i64: 128, 16>}, {transform_indices = @transform_1, window_bounds = array<i64: 128, 16>}]} {
    %c0 = arith.constant 0 : index
    %c0_0 = arith.constant 0 : index
    %0 = vector.load %arg1[%c0, %c0_0] : memref<128x16xf32, #tpu.memory_space<vmem>>, vector<128x16xf32>
    %1 = tpu.iota {dimensions = array<i32: 1>} : vector<128x16xi32>
    %2 = arith.cmpf one, %0, %0 : vector<128x16xf32>
    %cst = arith.constant 0x7F800000 : f32
    %3 = vector.broadcast %cst : f32 to vector<128x16xf32>
    %4 = arith.select %2, %3, %0 : vector<128x16xi1>, vector<128x16xf32>
    %cst_1 = arith.constant dense<0xFF800000> : vector<128xf32>
    %5 = vector.multi_reduction <maximumf>, %4, %cst_1 [1] : vector<128x16xf32> to vector<128xf32>
    %6 = vector.shape_cast %5 : vector<128xf32> to vector<128x1xf32>
    %7 = vector.broadcast %6 : vector<128x1xf32> to vector<128x16xf32>
    %8 = arith.cmpf oeq, %4, %7 : vector<128x16xf32>
    %c16_i32 = arith.constant 16 : i32
    %9 = vector.broadcast %c16_i32 : i32 to vector<128x16xi32>
    %10 = arith.select %8, %1, %9 : vector<128x16xi1>, vector<128x16xi32>
    %cst_2 = arith.constant dense<2147483647> : vector<128xi32>
    %11 = vector.multi_reduction <minsi>, %10, %cst_2 [1] : vector<128x16xi32> to vector<128xi32>
    %12 = vector.shape_cast %11 : vector<128xi32> to vector<128x1xi32>
    %13 = vector.broadcast %12 : vector<128x1xi32> to vector<128x16xi32>
    %14 = arith.cmpi eq, %1, %13 : vector<128x16xi32>
    %cst_3 = arith.constant 0xFF800000 : f32
    %15 = vector.broadcast %cst_3 : f32 to vector<128x16xf32>
    %16 = arith.select %14, %15, %4 : vector<128x16xi1>, vector<128x16xf32>
    %cst_4 = arith.constant dense<0xFF800000> : vector<128xf32>
    %17 = vector.multi_reduction <maximumf>, %16, %cst_4 [1] : vector<128x16xf32> to vector<128xf32>
    %18 = vector.shape_cast %17 : vector<128xf32> to vector<128x1xf32>
    %19 = vector.broadcast %18 : vector<128x1xf32> to vector<128x16xf32>
    %20 = arith.cmpf oeq, %16, %19 : vector<128x16xf32>
    %c16_i32_5 = arith.constant 16 : i32
    %21 = vector.broadcast %c16_i32_5 : i32 to vector<128x16xi32>
    %22 = arith.select %20, %1, %21 : vector<128x16xi1>, vector<128x16xi32>
    %cst_6 = arith.constant dense<2147483647> : vector<128xi32>
    %23 = vector.multi_reduction <minsi>, %22, %cst_6 [1] : vector<128x16xi32> to vector<128xi32>
    %24 = vector.shape_cast %23 : vector<128xi32> to vector<128x1xi32>
    %25 = vector.broadcast %24 : vector<128x1xi32> to vector<128x16xi32>
    %26 = arith.cmpi eq, %1, %25 : vector<128x16xi32>
    %cst_7 = arith.constant 0xFF800000 : f32
    %27 = vector.broadcast %cst_7 : f32 to vector<128x16xf32>
    %28 = arith.select %26, %27, %16 : vector<128x16xi1>, vector<128x16xf32>
    %cst_8 = arith.constant dense<0xFF800000> : vector<128xf32>
    %29 = vector.multi_reduction <maximumf>, %28, %cst_8 [1] : vector<128x16xf32> to vector<128xf32>
    %30 = vector.shape_cast %29 : vector<128xf32> to vector<128x1xf32>
    %31 = vector.broadcast %30 : vector<128x1xf32> to vector<128x16xf32>
    %32 = arith.cmpf oeq, %28, %31 : vector<128x16xf32>
    %c16_i32_9 = arith.constant 16 : i32
    %33 = vector.broadcast %c16_i32_9 : i32 to vector<128x16xi32>
    %34 = arith.select %32, %1, %33 : vector<128x16xi1>, vector<128x16xi32>
    %cst_10 = arith.constant dense<2147483647> : vector<128xi32>
    %35 = vector.multi_reduction <minsi>, %34, %cst_10 [1] : vector<128x16xi32> to vector<128xi32>
    %36 = vector.shape_cast %35 : vector<128xi32> to vector<128x1xi32>
    %37 = vector.broadcast %36 : vector<128x1xi32> to vector<128x16xi32>
    %38 = arith.cmpi eq, %1, %37 : vector<128x16xi32>
    %cst_11 = arith.constant 0xFF800000 : f32
    %39 = vector.broadcast %cst_11 : f32 to vector<128x16xf32>
    %40 = arith.select %38, %39, %28 : vector<128x16xi1>, vector<128x16xf32>
    %cst_12 = arith.constant 0xFF800000 : f32
    %41 = vector.broadcast %cst_12 : f32 to vector<128x16xf32>
    %42 = arith.cmpf oeq, %40, %41 : vector<128x16xf32>
    %c0_i32 = arith.constant 0 : i32
    %43 = arith.sitofp %c0_i32 : i32 to f32
    %44 = vector.broadcast %43 : f32 to vector<128x16xf32>
    %45 = arith.select %42, %0, %44 : vector<128x16xi1>, vector<128x16xf32>
    %c0_13 = arith.constant 0 : index
    %c0_14 = arith.constant 0 : index
    %46 = vector.load %arg2[%c0_13, %c0_14] : memref<128x16xf32, #tpu.memory_space<vmem>>, vector<128x16xf32>
    tpu.vector_store %arg2[%c0_13, %c0_14], %45 {strides = array<i32>} : memref<128x16xf32, #tpu.memory_space<vmem>>, vector<128x16xf32>,
    return
  }
  func.func @transform_0(%arg0: i32) -> (i32, i32) {
    %c0_i32 = arith.constant 0 : i32
    %c0_i32_0 = arith.constant 0 : i32
    return %arg0, %c0_i32 : i32, i32
  }
  func.func @transform_1(%arg0: i32) -> (i32, i32) {
    %c0_i32 = arith.constant 0 : i32
    %c0_i32_0 = arith.constant 0 : i32
    return %arg0, %c0_i32 : i32, i32
  }
}

</mosaic_0001>

<llo_original>
// kernel: tpu_custom_call.1
$region0: #{tpu_custom_call.1}
  #allocation0 [shape = 'u32[]', space=smem, size = 0x4, offset = 0x4, fixed_abs, tag = 'smem constant byte address 0x4 - core index']
  #allocation1 [shape = 'u32[144,128]{1,0:T(1,128)}', space=vmem, size = 0x12000, scoped, tag = 'internal scratch']
  %s0 = inlined_call_operand.vmem [shape: f32[128,16], index: 0, kind: input, shape index: {}]
  %s1 = inlined_call_operand.vmem [shape: f32[128,16], index: 1, kind: output, shape index: {}]
  %s2 = sld [smem:[#allocation0]]
  $region14: #{tpu_custom_call.1} parent=0
    _
  %s4 = ssub.s32 1, %s2
  %s5 = scalar_select 0, %s4, %s2
  // Predicated region
  $region2: #{tpu_custom_call.1} parent=0 // pred_check
    _
  $region3: #{tpu_custom_call.1} parent=0 // pred_check_branch
    %7 = sbr.rel (0) target = $region5
  $region4: #{tpu_custom_call.1} parent=0 // pred_region
    _
  $region5: #{tpu_custom_call.1} parent=0 // pred_fallthru
    _
  %v8 = vld [vmem:[%s0] sm:$0xff]
  %v9 = vld [vmem:[%s0 + $0x8] sm:$0xff]
  %v10 = vld [vmem:[%s0 + $0x10] sm:$0xff]
  %v11 = vld [vmem:[%s0 + $0x18] sm:$0xff]
  %v12 = vld [vmem:[%s0 + $0x20] sm:$0xff]
  %v13 = vld [vmem:[%s0 + $0x28] sm:$0xff]
  %v14 = vld [vmem:[%s0 + $0x30] sm:$0xff]
  %v15 = vld [vmem:[%s0 + $0x38] sm:$0xff]
  %v16 = vld [vmem:[%s0 + $0x40] sm:$0xff]
  %v17 = vld [vmem:[%s0 + $0x48] sm:$0xff]
  %v18 = vld [vmem:[%s0 + $0x50] sm:$0xff]
  %v19 = vld [vmem:[%s0 + $0x58] sm:$0xff]
  %v20 = vld [vmem:[%s0 + $0x60] sm:$0xff]
  %v21 = vld [vmem:[%s0 + $0x68] sm:$0xff]
  %v22 = vld [vmem:[%s0 + $0x70] sm:$0xff]
  %v23 = vld [vmem:[%s0 + $0x78] sm:$0xff]
  %v24 = vlaneseq
  %v25 = vand.u32 %v24, 127
  %vm26 = vcmp.ne.f32.partialorder %v8, %v8
  %vm27 = vcmp.ne.f32.partialorder %v9, %v9
  %vm28 = vcmp.ne.f32.partialorder %v10, %v10
  %vm29 = vcmp.ne.f32.partialorder %v11, %v11
  %vm30 = vcmp.ne.f32.partialorder %v12, %v12
  %vm31 = vcmp.ne.f32.partialorder %v13, %v13
  %vm32 = vcmp.ne.f32.partialorder %v14, %v14
  %vm33 = vcmp.ne.f32.partialorder %v15, %v15
  %vm34 = vcmp.ne.f32.partialorder %v16, %v16
  %vm35 = vcmp.ne.f32.partialorder %v17, %v17
  %vm36 = vcmp.ne.f32.partialorder %v18, %v18
  %vm37 = vcmp.ne.f32.partialorder %v19, %v19
  %vm38 = vcmp.ne.f32.partialorder %v20, %v20
  %vm39 = vcmp.ne.f32.partialorder %v21, %v21
  %vm40 = vcmp.ne.f32.partialorder %v22, %v22
  %vm41 = vcmp.ne.f32.partialorder %v23, %v23
  %v42 = vsel %vm26, inf, %v8
  %v43 = vsel %vm27, inf, %v9
  %v44 = vsel %vm28, inf, %v10
  %v45 = vsel %vm29, inf, %v11
  %v46 = vsel %vm30, inf, %v12
  %v47 = vsel %vm31, inf, %v13
  %v48 = vsel %vm32, inf, %v14
  %v49 = vsel %vm33, inf, %v15
  %v50 = vsel %vm34, inf, %v16
  %v51 = vsel %vm35, inf, %v17
  %v52 = vsel %vm36, inf, %v18
  %v53 = vsel %vm37, inf, %v19
  %v54 = vsel %vm38, inf, %v20
  %v55 = vsel %vm39, inf, %v21
  %v56 = vsel %vm40, inf, %v22
  %v57 = vsel %vm41, inf, %v23
  %vm58 = vcmask 130048
  %v59 = vsel %vm58, %v42, -inf
  %60 = vmax.xlane.f32.xlu0 %v59
  %v61 = vpop.xlane.xlu0 %60
  %v62 = vsel %vm58, %v43, -inf
  %63 = vmax.xlane.f32.xlu0 %v62
  %v64 = vpop.xlane.xlu0 %63
  %v65 = vsel %vm58, %v44, -inf
  %66 = vmax.xlane.f32.xlu0 %v65
  %v67 = vpop.xlane.xlu0 %66
  %v68 = vsel %vm58, %v45, -inf
  %69 = vmax.xlane.f32.xlu0 %v68
  %v70 = vpop.xlane.xlu0 %69
  %v71 = vsel %vm58, %v46, -inf
  %72 = vmax.xlane.f32.xlu0 %v71
  %v73 = vpop.xlane.xlu0 %72
  %v74 = vsel %vm58, %v47, -inf
  %75 = vmax.xlane.f32.xlu0 %v74
  %v76 = vpop.xlane.xlu0 %75
  %v77 = vsel %vm58, %v48, -inf
  %78 = vmax.xlane.f32.xlu0 %v77
  %v79 = vpop.xlane.xlu0 %78
  %v80 = vsel %vm58, %v49, -inf
  %81 = vmax.xlane.f32.xlu0 %v80
  %v82 = vpop.xlane.xlu0 %81
  %v83 = vsel %vm58, %v50, -inf
  %84 = vmax.xlane.f32.xlu0 %v83
  %v85 = vpop.xlane.xlu0 %84
  %v86 = vsel %vm58, %v51, -inf
  %87 = vmax.xlane.f32.xlu0 %v86
  %v88 = vpop.xlane.xlu0 %87
  %v89 = vsel %vm58, %v52, -inf
  %90 = vmax.xlane.f32.xlu0 %v89
  %v91 = vpop.xlane.xlu0 %90
  %v92 = vsel %vm58, %v53, -inf
  %93 = vmax.xlane.f32.xlu0 %v92
  %v94 = vpop.xlane.xlu0 %93
  %v95 = vsel %vm58, %v54, -inf
  %96 = vmax.xlane.f32.xlu0 %v95
  %v97 = vpop.xlane.xlu0 %96
  %v98 = vsel %vm58, %v55, -inf
  %99 = vmax.xlane.f32.xlu0 %v98
  %v100 = vpop.xlane.xlu0 %99
  %v101 = vsel %vm58, %v56, -inf
  %102 = vmax.xlane.f32.xlu0 %v101
  %v103 = vpop.xlane.xlu0 %102
  %v104 = vsel %vm58, %v57, -inf
  %105 = vmax.xlane.f32.xlu0 %v104
  %v106 = vpop.xlane.xlu0 %105
  %vm107 = vcmp.eq.f32.partialorder %v42, %v61
  %vm108 = vcmp.eq.f32.partialorder %v43, %v64
  %vm109 = vcmp.eq.f32.partialorder %v44, %v67
  %vm110 = vcmp.eq.f32.partialorder %v45, %v70
  %vm111 = vcmp.eq.f32.partialorder %v46, %v73
  %vm112 = vcmp.eq.f32.partialorder %v47, %v76
  %vm113 = vcmp.eq.f32.partialorder %v48, %v79
  %vm114 = vcmp.eq.f32.partialorder %v49, %v82
  %vm115 = vcmp.eq.f32.partialorder %v50, %v85
  %vm116 = vcmp.eq.f32.partialorder %v51, %v88
  %vm117 = vcmp.eq.f32.partialorder %v52, %v91
  %vm118 = vcmp.eq.f32.partialorder %v53, %v94
  %vm119 = vcmp.eq.f32.partialorder %v54, %v97
  %vm120 = vcmp.eq.f32.partialorder %v55, %v100
  %vm121 = vcmp.eq.f32.partialorder %v56, %v103
  %vm122 = vcmp.eq.f32.partialorder %v57, %v106
  %v123 = vsel %vm107, %v25, 16
  %v124 = vsel %vm108, %v25, 16
  %v125 = vsel %vm109, %v25, 16
  %v126 = vsel %vm110, %v25, 16
  %v127 = vsel %vm111, %v25, 16
  %v128 = vsel %vm112, %v25, 16
  %v129 = vsel %vm113, %v25, 16
  %v130 = vsel %vm114, %v25, 16
  %v131 = vsel %vm115, %v25, 16
  %v132 = vsel %vm116, %v25, 16
  %v133 = vsel %vm117, %v25, 16
  %v134 = vsel %vm118, %v25, 16
  %v135 = vsel %vm119, %v25, 16
  %v136 = vsel %vm120, %v25, 16
  %v137 = vsel %vm121, %v25, 16
  %v138 = vsel %vm122, %v25, 16
  %v139 = vsel %vm58, %v123, 2147483647
  %v140 = vand.u32 %v139, 65535
  %v141 = vshra.s32 %v139, 16
  %v142 = vcvt.s32.f32 %v140
  %v143 = vcvt.s32.f32 %v141
  %144 = vmin.xlane.f32.xlu0 %v143
  %v145 = vpop.xlane.xlu0 %144
  %vm146 = vcmp.eq.f32.partialorder %v143, %v145
  %v147 = vsel %vm146, %v142, inf
  %148 = vmin.xlane.f32.xlu0 %v147
  %v149 = vpop.xlane.xlu0 %148
  %v150 = vcvt.f32.s32 %v149
  %v151 = vcvt.f32.s32 %v145
  %v152 = vshll.u32 %v151, 16
  %v153 = vadd.s32 %v152, %v150
  %v154 = vsel %vm58, %v124, 2147483647
  %v155 = vand.u32 %v154, 65535
  %v156 = vshra.s32 %v154, 16
  %v157 = vcvt.s32.f32 %v155
  %v158 = vcvt.s32.f32 %v156
  %159 = vmin.xlane.f32.xlu0 %v158
  %v160 = vpop.xlane.xlu0 %159
  %vm161 = vcmp.eq.f32.partialorder %v158, %v160
  %v162 = vsel %vm161, %v157, inf
  %163 = vmin.xlane.f32.xlu0 %v162
  %v164 = vpop.xlane.xlu0 %163
  %v165 = vcvt.f32.s32 %v164
  %v166 = vcvt.f32.s32 %v160
  %v167 = vshll.u32 %v166, 16
  %v168 = vadd.s32 %v167, %v165
  %v169 = vsel %vm58, %v125, 2147483647
  %v170 = vand.u32 %v169, 65535
  %v171 = vshra.s32 %v169, 16
  %v172 = vcvt.s32.f32 %v170
  %v173 = vcvt.s32.f32 %v171
  %174 = vmin.xlane.f32.xlu0 %v173
  %v175 = vpop.xlane.xlu0 %174
  %vm176 = vcmp.eq.f32.partialorder %v173, %v175
  %v177 = vsel %vm176, %v172, inf
  %178 = vmin.xlane.f32.xlu0 %v177
  %v179 = vpop.xlane.xlu0 %178
  %v180 = vcvt.f32.s32 %v179
  %v181 = vcvt.f32.s32 %v175
  %v182 = vshll.u32 %v181, 16
  %v183 = vadd.s32 %v182, %v180
  %v184 = vsel %vm58, %v126, 2147483647
  %v185 = vand.u32 %v184, 65535
  %v186 = vshra.s32 %v184, 16
  %v187 = vcvt.s32.f32 %v185
  %v188 = vcvt.s32.f32 %v186
  %189 = vmin.xlane.f32.xlu0 %v188
  %v190 = vpop.xlane.xlu0 %189
  %vm191 = vcmp.eq.f32.partialorder %v188, %v190
  %v192 = vsel %vm191, %v187, inf
  %193 = vmin.xlane.f32.xlu0 %v192
  %v194 = vpop.xlane.xlu0 %193
  %v195 = vcvt.f32.s32 %v194
  %v196 = vcvt.f32.s32 %v190
  %v197 = vshll.u32 %v196, 16
  %v198 = vadd.s32 %v197, %v195
  %v199 = vsel %vm58, %v127, 2147483647
  %v200 = vand.u32 %v199, 65535
  %v201 = vshra.s32 %v199, 16
  %v202 = vcvt.s32.f32 %v200
  %v203 = vcvt.s32.f32 %v201
  %204 = vmin.xlane.f32.xlu0 %v203
  %v205 = vpop.xlane.xlu0 %204
  %vm206 = vcmp.eq.f32.partialorder %v203, %v205
  %v207 = vsel %vm206, %v202, inf
  %208 = vmin.xlane.f32.xlu0 %v207
  %v209 = vpop.xlane.xlu0 %208
  %v210 = vcvt.f32.s32 %v209
  %v211 = vcvt.f32.s32 %v205
  %v212 = vshll.u32 %v211, 16
  %v213 = vadd.s32 %v212, %v210
  %v214 = vsel %vm58, %v128, 2147483647
  %v215 = vand.u32 %v214, 65535
  %v216 = vshra.s32 %v214, 16
  %v217 = vcvt.s32.f32 %v215
  %v218 = vcvt.s32.f32 %v216
  %219 = vmin.xlane.f32.xlu0 %v218
  %v220 = vpop.xlane.xlu0 %219
  %vm221 = vcmp.eq.f32.partialorder %v218, %v220
  %v222 = vsel %vm221, %v217, inf
  %223 = vmin.xlane.f32.xlu0 %v222
  %v224 = vpop.xlane.xlu0 %223
  %v225 = vcvt.f32.s32 %v224
  %v226 = vcvt.f32.s32 %v220
  %v227 = vshll.u32 %v226, 16
  %v228 = vadd.s32 %v227, %v225
  %v229 = vsel %vm58, %v129, 2147483647
  %v230 = vand.u32 %v229, 65535
  %v231 = vshra.s32 %v229, 16
  %v232 = vcvt.s32.f32 %v230
  %v233 = vcvt.s32.f32 %v231
  %234 = vmin.xlane.f32.xlu0 %v233
  %v235 = vpop.xlane.xlu0 %234
  %vm236 = vcmp.eq.f32.partialorder %v233, %v235
  %v237 = vsel %vm236, %v232, inf
  %238 = vmin.xlane.f32.xlu0 %v237
  %v239 = vpop.xlane.xlu0 %238
  %v240 = vcvt.f32.s32 %v239
  %v241 = vcvt.f32.s32 %v235
  %v242 = vshll.u32 %v241, 16
  %v243 = vadd.s32 %v242, %v240
  %v244 = vsel %vm58, %v130, 2147483647
  %v245 = vand.u32 %v244, 65535
  %v246 = vshra.s32 %v244, 16
  %v247 = vcvt.s32.f32 %v245
  %v248 = vcvt.s32.f32 %v246
  %249 = vmin.xlane.f32.xlu0 %v248
  %v250 = vpop.xlane.xlu0 %249
  %vm251 = vcmp.eq.f32.partialorder %v248, %v250
  %v252 = vsel %vm251, %v247, inf
  %253 = vmin.xlane.f32.xlu0 %v252
  %v254 = vpop.xlane.xlu0 %253
  %v255 = vcvt.f32.s32 %v254
  %v256 = vcvt.f32.s32 %v250
  %v257 = vshll.u32 %v256, 16
  %v258 = vadd.s32 %v257, %v255
  %v259 = vsel %vm58, %v131, 2147483647
  %v260 = vand.u32 %v259, 65535
  %v261 = vshra.s32 %v259, 16
  %v262 = vcvt.s32.f32 %v260
  %v263 = vcvt.s32.f32 %v261
  %264 = vmin.xlane.f32.xlu0 %v263
  %v265 = vpop.xlane.xlu0 %264
  %vm266 = vcmp.eq.f32.partialorder %v263, %v265
  %v267 = vsel %vm266, %v262, inf
  %268 = vmin.xlane.f32.xlu0 %v267
  %v269 = vpop.xlane.xlu0 %268
  %v270 = vcvt.f32.s32 %v269
  %v271 = vcvt.f32.s32 %v265
  %v272 = vshll.u32 %v271, 16
  %v273 = vadd.s32 %v272, %v270
  %v274 = vsel %vm58, %v132, 2147483647
  %v275 = vand.u32 %v274, 65535
  %v276 = vshra.s32 %v274, 16
  %v277 = vcvt.s32.f32 %v275
  %v278 = vcvt.s32.f32 %v276
  %279 = vmin.xlane.f32.xlu0 %v278
  %v280 = vpop.xlane.xlu0 %279
  %vm281 = vcmp.eq.f32.partialorder %v278, %v280
  %v282 = vsel %vm281, %v277, inf
  %283 = vmin.xlane.f32.xlu0 %v282
  %v284 = vpop.xlane.xlu0 %283
  %v285 = vcvt.f32.s32 %v284
  %v286 = vcvt.f32.s32 %v280
  %v287 = vshll.u32 %v286, 16
  %v288 = vadd.s32 %v287, %v285
  %v289 = vsel %vm58, %v133, 2147483647
  %v290 = vand.u32 %v289, 65535
  %v291 = vshra.s32 %v289, 16
  %v292 = vcvt.s32.f32 %v290
  %v293 = vcvt.s32.f32 %v291
  %294 = vmin.xlane.f32.xlu0 %v293
  %v295 = vpop.xlane.xlu0 %294
  %vm296 = vcmp.eq.f32.partialorder %v293, %v295
  %v297 = vsel %vm296, %v292, inf
  %298 = vmin.xlane.f32.xlu0 %v297
  %v299 = vpop.xlane.xlu0 %298
  %v300 = vcvt.f32.s32 %v299
  %v301 = vcvt.f32.s32 %v295
  %v302 = vshll.u32 %v301, 16
  %v303 = vadd.s32 %v302, %v300
  %v304 = vsel %vm58, %v134, 2147483647
  %v305 = vand.u32 %v304, 65535
  %v306 = vshra.s32 %v304, 16
  %v307 = vcvt.s32.f32 %v305
  %v308 = vcvt.s32.f32 %v306
  %309 = vmin.xlane.f32.xlu0 %v308
  %v310 = vpop.xlane.xlu0 %309
  %vm311 = vcmp.eq.f32.partialorder %v308, %v310
  %v312 = vsel %vm311, %v307, inf
  %313 = vmin.xlane.f32.xlu0 %v312
  %v314 = vpop.xlane.xlu0 %313
  %v315 = vcvt.f32.s32 %v314
  %v316 = vcvt.f32.s32 %v310
  %v317 = vshll.u32 %v316, 16
  %v318 = vadd.s32 %v317, %v315
  %v319 = vsel %vm58, %v135, 2147483647
  %v320 = vand.u32 %v319, 65535
  %v321 = vshra.s32 %v319, 16
  %v322 = vcvt.s32.f32 %v320
  %v323 = vcvt.s32.f32 %v321
  %324 = vmin.xlane.f32.xlu0 %v323
  %v325 = vpop.xlane.xlu0 %324
  %vm326 = vcmp.eq.f32.partialorder %v323, %v325
  %v327 = vsel %vm326, %v322, inf
  %328 = vmin.xlane.f32.xlu0 %v327
  %v329 = vpop.xlane.xlu0 %328
  %v330 = vcvt.f32.s32 %v329
  %v331 = vcvt.f32.s32 %v325
  %v332 = vshll.u32 %v331, 16
  %v333 = vadd.s32 %v332, %v330
  %v334 = vsel %vm58, %v136, 2147483647
  %v335 = vand.u32 %v334, 65535
  %v336 = vshra.s32 %v334, 16
  %v337 = vcvt.s32.f32 %v335
  %v338 = vcvt.s32.f32 %v336
  %339 = vmin.xlane.f32.xlu0 %v338
  %v340 = vpop.xlane.xlu0 %339
  %vm341 = vcmp.eq.f32.partialorder %v338, %v340
  %v342 = vsel %vm341, %v337, inf
  %343 = vmin.xlane.f32.xlu0 %v342
  %v344 = vpop.xlane.xlu0 %343
  %v345 = vcvt.f32.s32 %v344
  %v346 = vcvt.f32.s32 %v340
  %v347 = vshll.u32 %v346, 16
  %v348 = vadd.s32 %v347, %v345
  %v349 = vsel %vm58, %v137, 2147483647
  %v350 = vand.u32 %v349, 65535
  %v351 = vshra.s32 %v349, 16
  %v352 = vcvt.s32.f32 %v350
  %v353 = vcvt.s32.f32 %v351
  %354 = vmin.xlane.f32.xlu0 %v353
  %v355 = vpop.xlane.xlu0 %354
  %vm356 = vcmp.eq.f32.partialorder %v353, %v355
  %v357 = vsel %vm356, %v352, inf
  %358 = vmin.xlane.f32.xlu0 %v357
  %v359 = vpop.xlane.xlu0 %358
  %v360 = vcvt.f32.s32 %v359
  %v361 = vcvt.f32.s32 %v355
  %v362 = vshll.u32 %v361, 16
  %v363 = vadd.s32 %v362, %v360
  %v364 = vsel %vm58, %v138, 2147483647
  %v365 = vand.u32 %v364, 65535
  %v366 = vshra.s32 %v364, 16
  %v367 = vcvt.s32.f32 %v365
  %v368 = vcvt.s32.f32 %v366
  %369 = vmin.xlane.f32.xlu0 %v368
  %v370 = vpop.xlane.xlu0 %369
  %vm371 = vcmp.eq.f32.partialorder %v368, %v370
  %v372 = vsel %vm371, %v367, inf
  %373 = vmin.xlane.f32.xlu0 %v372
  %v374 = vpop.xlane.xlu0 %373
  %v375 = vcvt.f32.s32 %v374
  %v376 = vcvt.f32.s32 %v370
  %v377 = vshll.u32 %v376, 16
  %v378 = vadd.s32 %v377, %v375
  %vm379 = vcmp.eq.s32.totalorder %v25, %v153
  %vm380 = vcmp.eq.s32.totalorder %v25, %v168
  %vm381 = vcmp.eq.s32.totalorder %v25, %v183
  %vm382 = vcmp.eq.s32.totalorder %v25, %v198
  %vm383 = vcmp.eq.s32.totalorder %v25, %v213
  %vm384 = vcmp.eq.s32.totalorder %v25, %v228
  %vm385 = vcmp.eq.s32.totalorder %v25, %v243
  %vm386 = vcmp.eq.s32.totalorder %v25, %v258
  %vm387 = vcmp.eq.s32.totalorder %v25, %v273
  %vm388 = vcmp.eq.s32.totalorder %v25, %v288
  %vm389 = vcmp.eq.s32.totalorder %v25, %v303
  %vm390 = vcmp.eq.s32.totalorder %v25, %v318
  %vm391 = vcmp.eq.s32.totalorder %v25, %v333
  %vm392 = vcmp.eq.s32.totalorder %v25, %v348
  %vm393 = vcmp.eq.s32.totalorder %v25, %v363
  %vm394 = vcmp.eq.s32.totalorder %v25, %v378
  %v395 = vsel %vm379, -inf, %v42
  %v396 = vsel %vm380, -inf, %v43
  %v397 = vsel %vm381, -inf, %v44
  %v398 = vsel %vm382, -inf, %v45
  %v399 = vsel %vm383, -inf, %v46
  %v400 = vsel %vm384, -inf, %v47
  %v401 = vsel %vm385, -inf, %v48
  %v402 = vsel %vm386, -inf, %v49
  %v403 = vsel %vm387, -inf, %v50
  %v404 = vsel %vm388, -inf, %v51
  %v405 = vsel %vm389, -inf, %v52
  %v406 = vsel %vm390, -inf, %v53
  %v407 = vsel %vm391, -inf, %v54
  %v408 = vsel %vm392, -inf, %v55
  %v409 = vsel %vm393, -inf, %v56
  %v410 = vsel %vm394, -inf, %v57
  %v411 = vsel %vm58, %v395, -inf
  %412 = vmax.xlane.f32.xlu0 %v411
  %v413 = vpop.xlane.xlu0 %412
  %v414 = vsel %vm58, %v396, -inf
  %415 = vmax.xlane.f32.xlu0 %v414
  %v416 = vpop.xlane.xlu0 %415
  %v417 = vsel %vm58, %v397, -inf
  %418 = vmax.xlane.f32.xlu0 %v417
  %v419 = vpop.xlane.xlu0 %418
  %v420 = vsel %vm58, %v398, -inf
  %421 = vmax.xlane.f32.xlu0 %v420
  %v422 = vpop.xlane.xlu0 %421
  %v423 = vsel %vm58, %v399, -inf
  %424 = vmax.xlane.f32.xlu0 %v423
  %v425 = vpop.xlane.xlu0 %424
  %v426 = vsel %vm58, %v400, -inf
  %427 = vmax.xlane.f32.xlu0 %v426
  %v428 = vpop.xlane.xlu0 %427
  %v429 = vsel %vm58, %v401, -inf
  %430 = vmax.xlane.f32.xlu0 %v429
  %v431 = vpop.xlane.xlu0 %430
  %v432 = vsel %vm58, %v402, -inf
  %433 = vmax.xlane.f32.xlu0 %v432
  %v434 = vpop.xlane.xlu0 %433
  %v435 = vsel %vm58, %v403, -inf
  %436 = vmax.xlane.f32.xlu0 %v435
  %v437 = vpop.xlane.xlu0 %436
  %v438 = vsel %vm58, %v404, -inf
  %439 = vmax.xlane.f32.xlu0 %v438
  %v440 = vpop.xlane.xlu0 %439
  %v441 = vsel %vm58, %v405, -inf
  %442 = vmax.xlane.f32.xlu0 %v441
  %v443 = vpop.xlane.xlu0 %442
  %v444 = vsel %vm58, %v406, -inf
  %445 = vmax.xlane.f32.xlu0 %v444
  %v446 = vpop.xlane.xlu0 %445
  %v447 = vsel %vm58, %v407, -inf
  %448 = vmax.xlane.f32.xlu0 %v447
  %v449 = vpop.xlane.xlu0 %448
  %v450 = vsel %vm58, %v408, -inf
  %451 = vmax.xlane.f32.xlu0 %v450
  %v452 = vpop.xlane.xlu0 %451
  %v453 = vsel %vm58, %v409, -inf
  %454 = vmax.xlane.f32.xlu0 %v453
  %v455 = vpop.xlane.xlu0 %454
  %v456 = vsel %vm58, %v410, -inf
  %457 = vmax.xlane.f32.xlu0 %v456
  %v458 = vpop.xlane.xlu0 %457
  %vm459 = vcmp.eq.f32.partialorder %v395, %v413
  %vm460 = vcmp.eq.f32.partialorder %v396, %v416
  %vm461 = vcmp.eq.f32.partialorder %v397, %v419
  %vm462 = vcmp.eq.f32.partialorder %v398, %v422
  %vm463 = vcmp.eq.f32.partialorder %v399, %v425
  %vm464 = vcmp.eq.f32.partialorder %v400, %v428
  %vm465 = vcmp.eq.f32.partialorder %v401, %v431
  %vm466 = vcmp.eq.f32.partialorder %v402, %v434
  %vm467 = vcmp.eq.f32.partialorder %v403, %v437
  %vm468 = vcmp.eq.f32.partialorder %v404, %v440
  %vm469 = vcmp.eq.f32.partialorder %v405, %v443
  %vm470 = vcmp.eq.f32.partialorder %v406, %v446
  %vm471 = vcmp.eq.f32.partialorder %v407, %v449
  %vm472 = vcmp.eq.f32.partialorder %v408, %v452
  %vm473 = vcmp.eq.f32.partialorder %v409, %v455
  %vm474 = vcmp.eq.f32.partialorder %v410, %v458
  %v475 = vsel %vm459, %v25, 16
  %v476 = vsel %vm460, %v25, 16
  %v477 = vsel %vm461, %v25, 16
  %v478 = vsel %vm462, %v25, 16
  %v479 = vsel %vm463, %v25, 16
  %v480 = vsel %vm464, %v25, 16
  %v481 = vsel %vm465, %v25, 16
  %v482 = vsel %vm466, %v25, 16
  %v483 = vsel %vm467, %v25, 16
  %v484 = vsel %vm468, %v25, 16
  %v485 = vsel %vm469, %v25, 16
  %v486 = vsel %vm470, %v25, 16
  %v487 = vsel %vm471, %v25, 16
  %v488 = vsel %vm472, %v25, 16
  %v489 = vsel %vm473, %v25, 16
  %v490 = vsel %vm474, %v25, 16
  %v491 = vsel %vm58, %v475, 2147483647
  %v492 = vand.u32 %v491, 65535
  %v493 = vshra.s32 %v491, 16
  %v494 = vcvt.s32.f32 %v492
  %v495 = vcvt.s32.f32 %v493
  %496 = vmin.xlane.f32.xlu0 %v495
  %v497 = vpop.xlane.xlu0 %496
  %vm498 = vcmp.eq.f32.partialorder %v495, %v497
  %v499 = vsel %vm498, %v494, inf
  %500 = vmin.xlane.f32.xlu0 %v499
  %v501 = vpop.xlane.xlu0 %500
  %v502 = vcvt.f32.s32 %v501
  %v503 = vcvt.f32.s32 %v497
  %v504 = vshll.u32 %v503, 16
  %v505 = vadd.s32 %v504, %v502
  %v506 = vsel %vm58, %v476, 2147483647
  %v507 = vand.u32 %v506, 65535
  %v508 = vshra.s32 %v506, 16
  %v509 = vcvt.s32.f32 %v507
  %v510 = vcvt.s32.f32 %v508
  %511 = vmin.xlane.f32.xlu0 %v510
  %v512 = vpop.xlane.xlu0 %511
  %vm513 = vcmp.eq.f32.partialorder %v510, %v512
  %v514 = vsel %vm513, %v509, inf
  %515 = vmin.xlane.f32.xlu0 %v514
  %v516 = vpop.xlane.xlu0 %515
  %v517 = vcvt.f32.s32 %v516
  %v518 = vcvt.f32.s32 %v512
  %v519 = vshll.u32 %v518, 16
  %v520 = vadd.s32 %v519, %v517
  %v521 = vsel %vm58, %v477, 2147483647
  %v522 = vand.u32 %v521, 65535
  %v523 = vshra.s32 %v521, 16
  %v524 = vcvt.s32.f32 %v522
  %v525 = vcvt.s32.f32 %v523
  %526 = vmin.xlane.f32.xlu0 %v525
  %v527 = vpop.xlane.xlu0 %526
  %vm528 = vcmp.eq.f32.partialorder %v525, %v527
  %v529 = vsel %vm528, %v524, inf
  %530 = vmin.xlane.f32.xlu0 %v529
  %v531 = vpop.xlane.xlu0 %530
  %v532 = vcvt.f32.s32 %v531
  %v533 = vcvt.f32.s32 %v527
  %v534 = vshll.u32 %v533, 16
  %v535 = vadd.s32 %v534, %v532
  %v536 = vsel %vm58, %v478, 2147483647
  %v537 = vand.u32 %v536, 65535
  %v538 = vshra.s32 %v536, 16
  %v539 = vcvt.s32.f32 %v537
  %v540 = vcvt.s32.f32 %v538
  %541 = vmin.xlane.f32.xlu0 %v540
  %v542 = vpop.xlane.xlu0 %541
  %vm543 = vcmp.eq.f32.partialorder %v540, %v542
  %v544 = vsel %vm543, %v539, inf
  %545 = vmin.xlane.f32.xlu0 %v544
  %v546 = vpop.xlane.xlu0 %545
  %v547 = vcvt.f32.s32 %v546
  %v548 = vcvt.f32.s32 %v542
  %v549 = vshll.u32 %v548, 16
  %v550 = vadd.s32 %v549, %v547
  %v551 = vsel %vm58, %v479, 2147483647
  %v552 = vand.u32 %v551, 65535
  %v553 = vshra.s32 %v551, 16
  %v554 = vcvt.s32.f32 %v552
  %v555 = vcvt.s32.f32 %v553
  %556 = vmin.xlane.f32.xlu0 %v555
  %v557 = vpop.xlane.xlu0 %556
  %vm558 = vcmp.eq.f32.partialorder %v555, %v557
  %v559 = vsel %vm558, %v554, inf
  %560 = vmin.xlane.f32.xlu0 %v559
  %v561 = vpop.xlane.xlu0 %560
  %v562 = vcvt.f32.s32 %v561
  %v563 = vcvt.f32.s32 %v557
  %v564 = vshll.u32 %v563, 16
  %v565 = vadd.s32 %v564, %v562
  %v566 = vsel %vm58, %v480, 2147483647
  %v567 = vand.u32 %v566, 65535
  %v568 = vshra.s32 %v566, 16
  %v569 = vcvt.s32.f32 %v567
  %v570 = vcvt.s32.f32 %v568
  %571 = vmin.xlane.f32.xlu0 %v570
  %v572 = vpop.xlane.xlu0 %571
  %vm573 = vcmp.eq.f32.partialorder %v570, %v572
  %v574 = vsel %vm573, %v569, inf
  %575 = vmin.xlane.f32.xlu0 %v574
  %v576 = vpop.xlane.xlu0 %575
  %v577 = vcvt.f32.s32 %v576
  %v578 = vcvt.f32.s32 %v572
  %v579 = vshll.u32 %v578, 16
  %v580 = vadd.s32 %v579, %v577
  %v581 = vsel %vm58, %v481, 2147483647
  %v582 = vand.u32 %v581, 65535
  %v583 = vshra.s32 %v581, 16
  %v584 = vcvt.s32.f32 %v582
  %v585 = vcvt.s32.f32 %v583
  %586 = vmin.xlane.f32.xlu0 %v585
  %v587 = vpop.xlane.xlu0 %586
  %vm588 = vcmp.eq.f32.partialorder %v585, %v587
  %v589 = vsel %vm588, %v584, inf
  %590 = vmin.xlane.f32.xlu0 %v589
  %v591 = vpop.xlane.xlu0 %590
  %v592 = vcvt.f32.s32 %v591
  %v593 = vcvt.f32.s32 %v587
  %v594 = vshll.u32 %v593, 16
  %v595 = vadd.s32 %v594, %v592
  %v596 = vsel %vm58, %v482, 2147483647
  %v597 = vand.u32 %v596, 65535
  %v598 = vshra.s32 %v596, 16
  %v599 = vcvt.s32.f32 %v597
  %v600 = vcvt.s32.f32 %v598
  %601 = vmin.xlane.f32.xlu0 %v600
  %v602 = vpop.xlane.xlu0 %601
  %vm603 = vcmp.eq.f32.partialorder %v600, %v602
  %v604 = vsel %vm603, %v599, inf
  %605 = vmin.xlane.f32.xlu0 %v604
  %v606 = vpop.xlane.xlu0 %605
  %v607 = vcvt.f32.s32 %v606
  %v608 = vcvt.f32.s32 %v602
  %v609 = vshll.u32 %v608, 16
  %v610 = vadd.s32 %v609, %v607
  %v611 = vsel %vm58, %v483, 2147483647
  %v612 = vand.u32 %v611, 65535
  %v613 = vshra.s32 %v611, 16
  %v614 = vcvt.s32.f32 %v612
  %v615 = vcvt.s32.f32 %v613
  %616 = vmin.xlane.f32.xlu0 %v615
  %v617 = vpop.xlane.xlu0 %616
  %vm618 = vcmp.eq.f32.partialorder %v615, %v617
  %v619 = vsel %vm618, %v614, inf
  %620 = vmin.xlane.f32.xlu0 %v619
  %v621 = vpop.xlane.xlu0 %620
  %v622 = vcvt.f32.s32 %v621
  %v623 = vcvt.f32.s32 %v617
  %v624 = vshll.u32 %v623, 16
  %v625 = vadd.s32 %v624, %v622
  %v626 = vsel %vm58, %v484, 2147483647
  %v627 = vand.u32 %v626, 65535
  %v628 = vshra.s32 %v626, 16
  %v629 = vcvt.s32.f32 %v627
  %v630 = vcvt.s32.f32 %v628
  %631 = vmin.xlane.f32.xlu0 %v630
  %v632 = vpop.xlane.xlu0 %631
  %vm633 = vcmp.eq.f32.partialorder %v630, %v632
  %v634 = vsel %vm633, %v629, inf
  %635 = vmin.xlane.f32.xlu0 %v634
  %v636 = vpop.xlane.xlu0 %635
  %v637 = vcvt.f32.s32 %v636
  %v638 = vcvt.f32.s32 %v632
  %v639 = vshll.u32 %v638, 16
  %v640 = vadd.s32 %v639, %v637
  %v641 = vsel %vm58, %v485, 2147483647
  %v642 = vand.u32 %v641, 65535
  %v643 = vshra.s32 %v641, 16
  %v644 = vcvt.s32.f32 %v642
  %v645 = vcvt.s32.f32 %v643
  %646 = vmin.xlane.f32.xlu0 %v645
  %v647 = vpop.xlane.xlu0 %646
  %vm648 = vcmp.eq.f32.partialorder %v645, %v647
  %v649 = vsel %vm648, %v644, inf
  %650 = vmin.xlane.f32.xlu0 %v649
  %v651 = vpop.xlane.xlu0 %650
  %v652 = vcvt.f32.s32 %v651
  %v653 = vcvt.f32.s32 %v647
  %v654 = vshll.u32 %v653, 16
  %v655 = vadd.s32 %v654, %v652
  %v656 = vsel %vm58, %v486, 2147483647
  %v657 = vand.u32 %v656, 65535
  %v658 = vshra.s32 %v656, 16
  %v659 = vcvt.s32.f32 %v657
  %v660 = vcvt.s32.f32 %v658
  %661 = vmin.xlane.f32.xlu0 %v660
  %v662 = vpop.xlane.xlu0 %661
  %vm663 = vcmp.eq.f32.partialorder %v660, %v662
  %v664 = vsel %vm663, %v659, inf
  %665 = vmin.xlane.f32.xlu0 %v664
  %v666 = vpop.xlane.xlu0 %665
  %v667 = vcvt.f32.s32 %v666
  %v668 = vcvt.f32.s32 %v662
  %v669 = vshll.u32 %v668, 16
  %v670 = vadd.s32 %v669, %v667
  %v671 = vsel %vm58, %v487, 2147483647
  %v672 = vand.u32 %v671, 65535
  %v673 = vshra.s32 %v671, 16
  %v674 = vcvt.s32.f32 %v672
  %v675 = vcvt.s32.f32 %v673
  %676 = vmin.xlane.f32.xlu0 %v675
  %v677 = vpop.xlane.xlu0 %676
  %vm678 = vcmp.eq.f32.partialorder %v675, %v677
  %v679 = vsel %vm678, %v674, inf
  %680 = vmin.xlane.f32.xlu0 %v679
  %v681 = vpop.xlane.xlu0 %680
  %v682 = vcvt.f32.s32 %v681
  %v683 = vcvt.f32.s32 %v677
  %v684 = vshll.u32 %v683, 16
  %v685 = vadd.s32 %v684, %v682
  %v686 = vsel %vm58, %v488, 2147483647
  %v687 = vand.u32 %v686, 65535
  %v688 = vshra.s32 %v686, 16
  %v689 = vcvt.s32.f32 %v687
  %v690 = vcvt.s32.f32 %v688
  %691 = vmin.xlane.f32.xlu0 %v690
  %v692 = vpop.xlane.xlu0 %691
  %vm693 = vcmp.eq.f32.partialorder %v690, %v692
  %v694 = vsel %vm693, %v689, inf
  %695 = vmin.xlane.f32.xlu0 %v694
  %v696 = vpop.xlane.xlu0 %695
  %v697 = vcvt.f32.s32 %v696
  %v698 = vcvt.f32.s32 %v692
  %v699 = vshll.u32 %v698, 16
  %v700 = vadd.s32 %v699, %v697
  %v701 = vsel %vm58, %v489, 2147483647
  %v702 = vand.u32 %v701, 65535
  %v703 = vshra.s32 %v701, 16
  %v704 = vcvt.s32.f32 %v702
  %v705 = vcvt.s32.f32 %v703
  %706 = vmin.xlane.f32.xlu0 %v705
  %v707 = vpop.xlane.xlu0 %706
  %vm708 = vcmp.eq.f32.partialorder %v705, %v707
  %v709 = vsel %vm708, %v704, inf
  %710 = vmin.xlane.f32.xlu0 %v709
  %v711 = vpop.xlane.xlu0 %710
  %v712 = vcvt.f32.s32 %v711
  %v713 = vcvt.f32.s32 %v707
  %v714 = vshll.u32 %v713, 16
  %v715 = vadd.s32 %v714, %v712
  %v716 = vsel %vm58, %v490, 2147483647
  %v717 = vand.u32 %v716, 65535
  %v718 = vshra.s32 %v716, 16
  %v719 = vcvt.s32.f32 %v717
  %v720 = vcvt.s32.f32 %v718
  %721 = vmin.xlane.f32.xlu0 %v720
  %v722 = vpop.xlane.xlu0 %721
  %vm723 = vcmp.eq.f32.partialorder %v720, %v722
  %v724 = vsel %vm723, %v719, inf
  %725 = vmin.xlane.f32.xlu0 %v724
  %v726 = vpop.xlane.xlu0 %725
  %v727 = vcvt.f32.s32 %v726
  %v728 = vcvt.f32.s32 %v722
  %v729 = vshll.u32 %v728, 16
  %v730 = vadd.s32 %v729, %v727
  %vm731 = vcmp.eq.s32.totalorder %v25, %v505
  %vm732 = vcmp.eq.s32.totalorder %v25, %v520
  %vm733 = vcmp.eq.s32.totalorder %v25, %v535
  %vm734 = vcmp.eq.s32.totalorder %v25, %v550
  %vm735 = vcmp.eq.s32.totalorder %v25, %v565
  %vm736 = vcmp.eq.s32.totalorder %v25, %v580
  %vm737 = vcmp.eq.s32.totalorder %v25, %v595
  %vm738 = vcmp.eq.s32.totalorder %v25, %v610
  %vm739 = vcmp.eq.s32.totalorder %v25, %v625
  %vm740 = vcmp.eq.s32.totalorder %v25, %v640
  %vm741 = vcmp.eq.s32.totalorder %v25, %v655
  %vm742 = vcmp.eq.s32.totalorder %v25, %v670
  %vm743 = vcmp.eq.s32.totalorder %v25, %v685
  %vm744 = vcmp.eq.s32.totalorder %v25, %v700
  %vm745 = vcmp.eq.s32.totalorder %v25, %v715
  %vm746 = vcmp.eq.s32.totalorder %v25, %v730
  %v747 = vsel %vm731, -inf, %v395
  %v748 = vsel %vm732, -inf, %v396
  %v749 = vsel %vm733, -inf, %v397
  %v750 = vsel %vm734, -inf, %v398
  %v751 = vsel %vm735, -inf, %v399
  %v752 = vsel %vm736, -inf, %v400
  %v753 = vsel %vm737, -inf, %v401
  %v754 = vsel %vm738, -inf, %v402
  %v755 = vsel %vm739, -inf, %v403
  %v756 = vsel %vm740, -inf, %v404
  %v757 = vsel %vm741, -inf, %v405
  %v758 = vsel %vm742, -inf, %v406
  %v759 = vsel %vm743, -inf, %v407
  %v760 = vsel %vm744, -inf, %v408
  %v761 = vsel %vm745, -inf, %v409
  %v762 = vsel %vm746, -inf, %v410
  %v763 = vsel %vm58, %v747, -inf
  %764 = vmax.xlane.f32.xlu0 %v763
  %v765 = vpop.xlane.xlu0 %764
  %v766 = vsel %vm58, %v748, -inf
  %767 = vmax.xlane.f32.xlu0 %v766
  %v768 = vpop.xlane.xlu0 %767
  %v769 = vsel %vm58, %v749, -inf
  %770 = vmax.xlane.f32.xlu0 %v769
  %v771 = vpop.xlane.xlu0 %770
  %v772 = vsel %vm58, %v750, -inf
  %773 = vmax.xlane.f32.xlu0 %v772
  %v774 = vpop.xlane.xlu0 %773
  %v775 = vsel %vm58, %v751, -inf
  %776 = vmax.xlane.f32.xlu0 %v775
  %v777 = vpop.xlane.xlu0 %776
  %v778 = vsel %vm58, %v752, -inf
  %779 = vmax.xlane.f32.xlu0 %v778
  %v780 = vpop.xlane.xlu0 %779
  %v781 = vsel %vm58, %v753, -inf
  %782 = vmax.xlane.f32.xlu0 %v781
  %v783 = vpop.xlane.xlu0 %782
  %v784 = vsel %vm58, %v754, -inf
  %785 = vmax.xlane.f32.xlu0 %v784
  %v786 = vpop.xlane.xlu0 %785
  %v787 = vsel %vm58, %v755, -inf
  %788 = vmax.xlane.f32.xlu0 %v787
  %v789 = vpop.xlane.xlu0 %788
  %v790 = vsel %vm58, %v756, -inf
  %791 = vmax.xlane.f32.xlu0 %v790
  %v792 = vpop.xlane.xlu0 %791
  %v793 = vsel %vm58, %v757, -inf
  %794 = vmax.xlane.f32.xlu0 %v793
  %v795 = vpop.xlane.xlu0 %794
  %v796 = vsel %vm58, %v758, -inf
  %797 = vmax.xlane.f32.xlu0 %v796
  %v798 = vpop.xlane.xlu0 %797
  %v799 = vsel %vm58, %v759, -inf
  %800 = vmax.xlane.f32.xlu0 %v799
  %v801 = vpop.xlane.xlu0 %800
  %v802 = vsel %vm58, %v760, -inf
  %803 = vmax.xlane.f32.xlu0 %v802
  %v804 = vpop.xlane.xlu0 %803
  %v805 = vsel %vm58, %v761, -inf
  %806 = vmax.xlane.f32.xlu0 %v805
  %v807 = vpop.xlane.xlu0 %806
  %v808 = vsel %vm58, %v762, -inf
  %809 = vmax.xlane.f32.xlu0 %v808
  %v810 = vpop.xlane.xlu0 %809
  %vm811 = vcmp.eq.f32.partialorder %v747, %v765
  %vm812 = vcmp.eq.f32.partialorder %v748, %v768
  %vm813 = vcmp.eq.f32.partialorder %v749, %v771
  %vm814 = vcmp.eq.f32.partialorder %v750, %v774
  %vm815 = vcmp.eq.f32.partialorder %v751, %v777
  %vm816 = vcmp.eq.f32.partialorder %v752, %v780
  %vm817 = vcmp.eq.f32.partialorder %v753, %v783
  %vm818 = vcmp.eq.f32.partialorder %v754, %v786
  %vm819 = vcmp.eq.f32.partialorder %v755, %v789
  %vm820 = vcmp.eq.f32.partialorder %v756, %v792
  %vm821 = vcmp.eq.f32.partialorder %v757, %v795
  %vm822 = vcmp.eq.f32.partialorder %v758, %v798
  %vm823 = vcmp.eq.f32.partialorder %v759, %v801
  %vm824 = vcmp.eq.f32.partialorder %v760, %v804
  %vm825 = vcmp.eq.f32.partialorder %v761, %v807
  %vm826 = vcmp.eq.f32.partialorder %v762, %v810
  %v827 = vsel %vm811, %v25, 16
  %v828 = vsel %vm812, %v25, 16
  %v829 = vsel %vm813, %v25, 16
  %v830 = vsel %vm814, %v25, 16
  %v831 = vsel %vm815, %v25, 16
  %v832 = vsel %vm816, %v25, 16
  %v833 = vsel %vm817, %v25, 16
  %v834 = vsel %vm818, %v25, 16
  %v835 = vsel %vm819, %v25, 16
  %v836 = vsel %vm820, %v25, 16
  %v837 = vsel %vm821, %v25, 16
  %v838 = vsel %vm822, %v25, 16
  %v839 = vsel %vm823, %v25, 16
  %v840 = vsel %vm824, %v25, 16
  %v841 = vsel %vm825, %v25, 16
  %v842 = vsel %vm826, %v25, 16
  %v843 = vsel %vm58, %v827, 2147483647
  %v844 = vand.u32 %v843, 65535
  %v845 = vshra.s32 %v843, 16
  %v846 = vcvt.s32.f32 %v844
  %v847 = vcvt.s32.f32 %v845
  %848 = vmin.xlane.f32.xlu0 %v847
  %v849 = vpop.xlane.xlu0 %848
  %vm850 = vcmp.eq.f32.partialorder %v847, %v849
  %v851 = vsel %vm850, %v846, inf
  %852 = vmin.xlane.f32.xlu0 %v851
  %v853 = vpop.xlane.xlu0 %852
  %v854 = vcvt.f32.s32 %v853
  %v855 = vcvt.f32.s32 %v849
  %v856 = vshll.u32 %v855, 16
  %v857 = vadd.s32 %v856, %v854
  %v858 = vsel %vm58, %v828, 2147483647
  %v859 = vand.u32 %v858, 65535
  %v860 = vshra.s32 %v858, 16
  %v861 = vcvt.s32.f32 %v859
  %v862 = vcvt.s32.f32 %v860
  %863 = vmin.xlane.f32.xlu0 %v862
  %v864 = vpop.xlane.xlu0 %863
  %vm865 = vcmp.eq.f32.partialorder %v862, %v864
  %v866 = vsel %vm865, %v861, inf
  %867 = vmin.xlane.f32.xlu0 %v866
  %v868 = vpop.xlane.xlu0 %867
  %v869 = vcvt.f32.s32 %v868
  %v870 = vcvt.f32.s32 %v864
  %v871 = vshll.u32 %v870, 16
  %v872 = vadd.s32 %v871, %v869
  %v873 = vsel %vm58, %v829, 2147483647
  %v874 = vand.u32 %v873, 65535
  %v875 = vshra.s32 %v873, 16
  %v876 = vcvt.s32.f32 %v874
  %v877 = vcvt.s32.f32 %v875
  %878 = vmin.xlane.f32.xlu0 %v877
  %v879 = vpop.xlane.xlu0 %878
  %vm880 = vcmp.eq.f32.partialorder %v877, %v879
  %v881 = vsel %vm880, %v876, inf
  %882 = vmin.xlane.f32.xlu0 %v881
  %v883 = vpop.xlane.xlu0 %882
  %v884 = vcvt.f32.s32 %v883
  %v885 = vcvt.f32.s32 %v879
  %v886 = vshll.u32 %v885, 16
  %v887 = vadd.s32 %v886, %v884
  %v888 = vsel %vm58, %v830, 2147483647
  %v889 = vand.u32 %v888, 65535
  %v890 = vshra.s32 %v888, 16
  %v891 = vcvt.s32.f32 %v889
  %v892 = vcvt.s32.f32 %v890
  %893 = vmin.xlane.f32.xlu0 %v892
  %v894 = vpop.xlane.xlu0 %893
  %vm895 = vcmp.eq.f32.partialorder %v892, %v894
  %v896 = vsel %vm895, %v891, inf
  %897 = vmin.xlane.f32.xlu0 %v896
  %v898 = vpop.xlane.xlu0 %897
  %v899 = vcvt.f32.s32 %v898
  %v900 = vcvt.f32.s32 %v894
  %v901 = vshll.u32 %v900, 16
  %v902 = vadd.s32 %v901, %v899
  %v903 = vsel %vm58, %v831, 2147483647
  %v904 = vand.u32 %v903, 65535
  %v905 = vshra.s32 %v903, 16
  %v906 = vcvt.s32.f32 %v904
  %v907 = vcvt.s32.f32 %v905
  %908 = vmin.xlane.f32.xlu0 %v907
  %v909 = vpop.xlane.xlu0 %908
  %vm910 = vcmp.eq.f32.partialorder %v907, %v909
  %v911 = vsel %vm910, %v906, inf
  %912 = vmin.xlane.f32.xlu0 %v911
  %v913 = vpop.xlane.xlu0 %912
  %v914 = vcvt.f32.s32 %v913
  %v915 = vcvt.f32.s32 %v909
  %v916 = vshll.u32 %v915, 16
  %v917 = vadd.s32 %v916, %v914
  %v918 = vsel %vm58, %v832, 2147483647
  %v919 = vand.u32 %v918, 65535
  %v920 = vshra.s32 %v918, 16
  %v921 = vcvt.s32.f32 %v919
  %v922 = vcvt.s32.f32 %v920
  %923 = vmin.xlane.f32.xlu0 %v922
  %v924 = vpop.xlane.xlu0 %923
  %vm925 = vcmp.eq.f32.partialorder %v922, %v924
  %v926 = vsel %vm925, %v921, inf
  %927 = vmin.xlane.f32.xlu0 %v926
  %v928 = vpop.xlane.xlu0 %927
  %v929 = vcvt.f32.s32 %v928
  %v930 = vcvt.f32.s32 %v924
  %v931 = vshll.u32 %v930, 16
  %v932 = vadd.s32 %v931, %v929
  %v933 = vsel %vm58, %v833, 2147483647
  %v934 = vand.u32 %v933, 65535
  %v935 = vshra.s32 %v933, 16
  %v936 = vcvt.s32.f32 %v934
  %v937 = vcvt.s32.f32 %v935
  %938 = vmin.xlane.f32.xlu0 %v937
  %v939 = vpop.xlane.xlu0 %938
  %vm940 = vcmp.eq.f32.partialorder %v937, %v939
  %v941 = vsel %vm940, %v936, inf
  %942 = vmin.xlane.f32.xlu0 %v941
  %v943 = vpop.xlane.xlu0 %942
  %v944 = vcvt.f32.s32 %v943
  %v945 = vcvt.f32.s32 %v939
  %v946 = vshll.u32 %v945, 16
  %v947 = vadd.s32 %v946, %v944
  %v948 = vsel %vm58, %v834, 2147483647
  %v949 = vand.u32 %v948, 65535
  %v950 = vshra.s32 %v948, 16
  %v951 = vcvt.s32.f32 %v949
  %v952 = vcvt.s32.f32 %v950
  %953 = vmin.xlane.f32.xlu0 %v952
  %v954 = vpop.xlane.xlu0 %953
  %vm955 = vcmp.eq.f32.partialorder %v952, %v954
  %v956 = vsel %vm955, %v951, inf
  %957 = vmin.xlane.f32.xlu0 %v956
  %v958 = vpop.xlane.xlu0 %957
  %v959 = vcvt.f32.s32 %v958
  %v960 = vcvt.f32.s32 %v954
  %v961 = vshll.u32 %v960, 16
  %v962 = vadd.s32 %v961, %v959
  %v963 = vsel %vm58, %v835, 2147483647
  %v964 = vand.u32 %v963, 65535
  %v965 = vshra.s32 %v963, 16
  %v966 = vcvt.s32.f32 %v964
  %v967 = vcvt.s32.f32 %v965
  %968 = vmin.xlane.f32.xlu0 %v967
  %v969 = vpop.xlane.xlu0 %968
  %vm970 = vcmp.eq.f32.partialorder %v967, %v969
  %v971 = vsel %vm970, %v966, inf
  %972 = vmin.xlane.f32.xlu0 %v971
  %v973 = vpop.xlane.xlu0 %972
  %v974 = vcvt.f32.s32 %v973
  %v975 = vcvt.f32.s32 %v969
  %v976 = vshll.u32 %v975, 16
  %v977 = vadd.s32 %v976, %v974
  %v978 = vsel %vm58, %v836, 2147483647
  %v979 = vand.u32 %v978, 65535
  %v980 = vshra.s32 %v978, 16
  %v981 = vcvt.s32.f32 %v979
  %v982 = vcvt.s32.f32 %v980
  %983 = vmin.xlane.f32.xlu0 %v982
  %v984 = vpop.xlane.xlu0 %983
  %vm985 = vcmp.eq.f32.partialorder %v982, %v984
  %v986 = vsel %vm985, %v981, inf
  %987 = vmin.xlane.f32.xlu0 %v986
  %v988 = vpop.xlane.xlu0 %987
  %v989 = vcvt.f32.s32 %v988
  %v990 = vcvt.f32.s32 %v984
  %v991 = vshll.u32 %v990, 16
  %v992 = vadd.s32 %v991, %v989
  %v993 = vsel %vm58, %v837, 2147483647
  %v994 = vand.u32 %v993, 65535
  %v995 = vshra.s32 %v993, 16
  %v996 = vcvt.s32.f32 %v994
  %v997 = vcvt.s32.f32 %v995
  %998 = vmin.xlane.f32.xlu0 %v997
  %v999 = vpop.xlane.xlu0 %998
  %vm1000 = vcmp.eq.f32.partialorder %v997, %v999
  %v1001 = vsel %vm1000, %v996, inf
  %1002 = vmin.xlane.f32.xlu0 %v1001
  %v1003 = vpop.xlane.xlu0 %1002
  %v1004 = vcvt.f32.s32 %v1003
  %v1005 = vcvt.f32.s32 %v999
  %v1006 = vshll.u32 %v1005, 16
  %v1007 = vadd.s32 %v1006, %v1004
  %v1008 = vsel %vm58, %v838, 2147483647
  %v1009 = vand.u32 %v1008, 65535
  %v1010 = vshra.s32 %v1008, 16
  %v1011 = vcvt.s32.f32 %v1009
  %v1012 = vcvt.s32.f32 %v1010
  %1013 = vmin.xlane.f32.xlu0 %v1012
  %v1014 = vpop.xlane.xlu0 %1013
  %vm1015 = vcmp.eq.f32.partialorder %v1012, %v1014
  %v1016 = vsel %vm1015, %v1011, inf
  %1017 = vmin.xlane.f32.xlu0 %v1016
  %v1018 = vpop.xlane.xlu0 %1017
  %v1019 = vcvt.f32.s32 %v1018
  %v1020 = vcvt.f32.s32 %v1014
  %v1021 = vshll.u32 %v1020, 16
  %v1022 = vadd.s32 %v1021, %v1019
  %v1023 = vsel %vm58, %v839, 2147483647
  %v1024 = vand.u32 %v1023, 65535
  %v1025 = vshra.s32 %v1023, 16
  %v1026 = vcvt.s32.f32 %v1024
  %v1027 = vcvt.s32.f32 %v1025
  %1028 = vmin.xlane.f32.xlu0 %v1027
  %v1029 = vpop.xlane.xlu0 %1028
  %vm1030 = vcmp.eq.f32.partialorder %v1027, %v1029
  %v1031 = vsel %vm1030, %v1026, inf
  %1032 = vmin.xlane.f32.xlu0 %v1031
  %v1033 = vpop.xlane.xlu0 %1032
  %v1034 = vcvt.f32.s32 %v1033
  %v1035 = vcvt.f32.s32 %v1029
  %v1036 = vshll.u32 %v1035, 16
  %v1037 = vadd.s32 %v1036, %v1034
  %v1038 = vsel %vm58, %v840, 2147483647
  %v1039 = vand.u32 %v1038, 65535
  %v1040 = vshra.s32 %v1038, 16
  %v1041 = vcvt.s32.f32 %v1039
  %v1042 = vcvt.s32.f32 %v1040
  %1043 = vmin.xlane.f32.xlu0 %v1042
  %v1044 = vpop.xlane.xlu0 %1043
  %vm1045 = vcmp.eq.f32.partialorder %v1042, %v1044
  %v1046 = vsel %vm1045, %v1041, inf
  %1047 = vmin.xlane.f32.xlu0 %v1046
  %v1048 = vpop.xlane.xlu0 %1047
  %v1049 = vcvt.f32.s32 %v1048
  %v1050 = vcvt.f32.s32 %v1044
  %v1051 = vshll.u32 %v1050, 16
  %v1052 = vadd.s32 %v1051, %v1049
  %v1053 = vsel %vm58, %v841, 2147483647
  %v1054 = vand.u32 %v1053, 65535
  %v1055 = vshra.s32 %v1053, 16
  %v1056 = vcvt.s32.f32 %v1054
  %v1057 = vcvt.s32.f32 %v1055
  %1058 = vmin.xlane.f32.xlu0 %v1057
  %v1059 = vpop.xlane.xlu0 %1058
  %vm1060 = vcmp.eq.f32.partialorder %v1057, %v1059
  %v1061 = vsel %vm1060, %v1056, inf
  %1062 = vmin.xlane.f32.xlu0 %v1061
  %v1063 = vpop.xlane.xlu0 %1062
  %v1064 = vcvt.f32.s32 %v1063
  %v1065 = vcvt.f32.s32 %v1059
  %v1066 = vshll.u32 %v1065, 16
  %v1067 = vadd.s32 %v1066, %v1064
  %v1068 = vsel %vm58, %v842, 2147483647
  %v1069 = vand.u32 %v1068, 65535
  %v1070 = vshra.s32 %v1068, 16
  %v1071 = vcvt.s32.f32 %v1069
  %v1072 = vcvt.s32.f32 %v1070
  %1073 = vmin.xlane.f32.xlu0 %v1072
  %v1074 = vpop.xlane.xlu0 %1073
  %vm1075 = vcmp.eq.f32.partialorder %v1072, %v1074
  %v1076 = vsel %vm1075, %v1071, inf
  %1077 = vmin.xlane.f32.xlu0 %v1076
  %v1078 = vpop.xlane.xlu0 %1077
  %v1079 = vcvt.f32.s32 %v1078
  %v1080 = vcvt.f32.s32 %v1074
  %v1081 = vshll.u32 %v1080, 16
  %v1082 = vadd.s32 %v1081, %v1079
  %vm1083 = vcmp.eq.s32.totalorder %v25, %v857
  %vm1084 = vcmp.eq.s32.totalorder %v25, %v872
  %vm1085 = vcmp.eq.s32.totalorder %v25, %v887
  %vm1086 = vcmp.eq.s32.totalorder %v25, %v902
  %vm1087 = vcmp.eq.s32.totalorder %v25, %v917
  %vm1088 = vcmp.eq.s32.totalorder %v25, %v932
  %vm1089 = vcmp.eq.s32.totalorder %v25, %v947
  %vm1090 = vcmp.eq.s32.totalorder %v25, %v962
  %vm1091 = vcmp.eq.s32.totalorder %v25, %v977
  %vm1092 = vcmp.eq.s32.totalorder %v25, %v992
  %vm1093 = vcmp.eq.s32.totalorder %v25, %v1007
  %vm1094 = vcmp.eq.s32.totalorder %v25, %v1022
  %vm1095 = vcmp.eq.s32.totalorder %v25, %v1037
  %vm1096 = vcmp.eq.s32.totalorder %v25, %v1052
  %vm1097 = vcmp.eq.s32.totalorder %v25, %v1067
  %vm1098 = vcmp.eq.s32.totalorder %v25, %v1082
  %v1099 = vsel %vm1083, -inf, %v747
  %v1100 = vsel %vm1084, -inf, %v748
  %v1101 = vsel %vm1085, -inf, %v749
  %v1102 = vsel %vm1086, -inf, %v750
  %v1103 = vsel %vm1087, -inf, %v751
  %v1104 = vsel %vm1088, -inf, %v752
  %v1105 = vsel %vm1089, -inf, %v753
  %v1106 = vsel %vm1090, -inf, %v754
  %v1107 = vsel %vm1091, -inf, %v755
  %v1108 = vsel %vm1092, -inf, %v756
  %v1109 = vsel %vm1093, -inf, %v757
  %v1110 = vsel %vm1094, -inf, %v758
  %v1111 = vsel %vm1095, -inf, %v759
  %v1112 = vsel %vm1096, -inf, %v760
  %v1113 = vsel %vm1097, -inf, %v761
  %v1114 = vsel %vm1098, -inf, %v762
  %vm1115 = vcmp.eq.f32.partialorder %v1099, -inf
  %vm1116 = vcmp.eq.f32.partialorder %v1100, -inf
  %vm1117 = vcmp.eq.f32.partialorder %v1101, -inf
  %vm1118 = vcmp.eq.f32.partialorder %v1102, -inf
  %vm1119 = vcmp.eq.f32.partialorder %v1103, -inf
  %vm1120 = vcmp.eq.f32.partialorder %v1104, -inf
  %vm1121 = vcmp.eq.f32.partialorder %v1105, -inf
  %vm1122 = vcmp.eq.f32.partialorder %v1106, -inf
  %vm1123 = vcmp.eq.f32.partialorder %v1107, -inf
  %vm1124 = vcmp.eq.f32.partialorder %v1108, -inf
  %vm1125 = vcmp.eq.f32.partialorder %v1109, -inf
  %vm1126 = vcmp.eq.f32.partialorder %v1110, -inf
  %vm1127 = vcmp.eq.f32.partialorder %v1111, -inf
  %vm1128 = vcmp.eq.f32.partialorder %v1112, -inf
  %vm1129 = vcmp.eq.f32.partialorder %v1113, -inf
  %vm1130 = vcmp.eq.f32.partialorder %v1114, -inf
  %v1131 = vsel %vm1115, %v8, 0.0
  %v1132 = vsel %vm1116, %v9, 0.0
  %v1133 = vsel %vm1117, %v10, 0.0
  %v1134 = vsel %vm1118, %v11, 0.0
  %v1135 = vsel %vm1119, %v12, 0.0
  %v1136 = vsel %vm1120, %v13, 0.0
  %v1137 = vsel %vm1121, %v14, 0.0
  %v1138 = vsel %vm1122, %v15, 0.0
  %v1139 = vsel %vm1123, %v16, 0.0
  %v1140 = vsel %vm1124, %v17, 0.0
  %v1141 = vsel %vm1125, %v18, 0.0
  %v1142 = vsel %vm1126, %v19, 0.0
  %v1143 = vsel %vm1127, %v20, 0.0
  %v1144 = vsel %vm1128, %v21, 0.0
  %v1145 = vsel %vm1129, %v22, 0.0
  %v1146 = vsel %vm1130, %v23, 0.0
  %1147 = vst.msk [vmem:[%s1] sm:$0xff] %vm58, %v1131
  %1148 = vst.msk [vmem:[%s1 + $0x8] sm:$0xff] %vm58, %v1132
  %1149 = vst.msk [vmem:[%s1 + $0x10] sm:$0xff] %vm58, %v1133
  %1150 = vst.msk [vmem:[%s1 + $0x18] sm:$0xff] %vm58, %v1134
  %1151 = vst.msk [vmem:[%s1 + $0x20] sm:$0xff] %vm58, %v1135
  %1152 = vst.msk [vmem:[%s1 + $0x28] sm:$0xff] %vm58, %v1136
  %1153 = vst.msk [vmem:[%s1 + $0x30] sm:$0xff] %vm58, %v1137
  %1154 = vst.msk [vmem:[%s1 + $0x38] sm:$0xff] %vm58, %v1138
  %1155 = vst.msk [vmem:[%s1 + $0x40] sm:$0xff] %vm58, %v1139
  %1156 = vst.msk [vmem:[%s1 + $0x48] sm:$0xff] %vm58, %v1140
  %1157 = vst.msk [vmem:[%s1 + $0x50] sm:$0xff] %vm58, %v1141
  %1158 = vst.msk [vmem:[%s1 + $0x58] sm:$0xff] %vm58, %v1142
  %1159 = vst.msk [vmem:[%s1 + $0x60] sm:$0xff] %vm58, %v1143
  %1160 = vst.msk [vmem:[%s1 + $0x68] sm:$0xff] %vm58, %v1144
  %1161 = vst.msk [vmem:[%s1 + $0x70] sm:$0xff] %vm58, %v1145
  %1162 = vst.msk [vmem:[%s1 + $0x78] sm:$0xff] %vm58, %v1146
  // Predicated region
  $region6: #{tpu_custom_call.1} parent=0 // pred_check
    _
  $region7: #{tpu_custom_call.1} parent=0 // pred_check_branch
    %1164 = sbr.rel (0) target = $region9
  $region8: #{tpu_custom_call.1} parent=0 // pred_region
    _
  $region9: #{tpu_custom_call.1} parent=0 // pred_fallthru
    _
  // Predicated region
  $region10: #{tpu_custom_call.1} parent=0 // pred_check
    _
  $region11: #{tpu_custom_call.1} parent=0 // pred_check_branch
    %1166 = sbr.rel (0) target = $region13
  $region12: #{tpu_custom_call.1} parent=0 // pred_region
    _
  $region13: #{tpu_custom_call.1} parent=0 // pred_fallthru
    _

</llo_original>
